<compile_context>
chip_gen: v5e
topology: v5e:2x2
jax: 0.10.0
libtpu: 0.0.40
codegen_flags: <defaults>
</compile_context>

<pallas_src>
import functools

import jax
import jax.numpy as jnp
from jax.experimental import pallas as pl
from jax.experimental.pallas import tpu as pltpu

_VMEM_LIMIT_BYTES = 32 * 1024 * 1024     # safe on v5e/v6e (128 MiB) and v7x (64 MiB)
_BLOCK_BUDGET_BYTES = 24 * 1024 * 1024   # pipeline buffers + in-kernel temporaries


# ---------------- matmul (one-hot gather) kernel ----------------
def _patch_dropout_matmul_kernel(idx_ref, x_ref, o_ref, *, precision):
    """Gather kept tokens for TB batch elements as a batched one-hot matmul.

    idx_ref : (TB, out_S, 1) int32  -- absolute source-row index per output row
    x_ref   : (TB, S, D)            -- full token sequences (input dtype)
    o_ref   : (TB, out_S, D)
    """
    idx = idx_ref[...]                               # (TB, out_S, 1) int32
    x = x_ref[...]                                   # (TB, S, D), native dtype
    tb, out_s, _ = idx.shape
    s = x.shape[1]

    # onehot[b, r, s] = 1 iff output row r of batch b copies input row s.
    cols = jax.lax.broadcasted_iota(jnp.int32, (tb, out_s, s), 2)
    onehot = (idx == cols).astype(x.dtype)           # input dtype, not f32

    out = jnp.einsum("bos,bsd->bod", onehot, x,
                     preferred_element_type=jnp.float32,
                     precision=precision)
    o_ref[...] = out.astype(o_ref.dtype)


# ---------------- DMA row-gather kernel ----------------
def _patch_dropout_dma_kernel(idx_ref, x_hbm, o_ref, sems):
    """Gather kept rows of one batch element with per-row HBM->VMEM DMAs.

    idx_ref : (B, out_S) int32 in SMEM (scalar-prefetched keep indices)
    x_hbm   : (B, S, D) in HBM (memory_space=pl.ANY)
    o_ref   : (1, out_S, D) output block in VMEM (DMA'd into directly)
    sems    : (out_S,) DMA semaphores
    """
    b = pl.program_id(0)
    out_s = o_ref.shape[1]

    def _copy(r, row):
        src = x_hbm.at[b, pl.ds(row, 1), :]          # (1, D) row in HBM
        dst = o_ref.at[0, pl.ds(r, 1), :]            # (1, D) row of the output
        return pltpu.make_async_copy(src, dst, sems.at[r])

    def issue(r, carry):
        _copy(r, idx_ref[b, r]).start()
        return carry

    jax.lax.fori_loop(0, out_s, issue, 0)

    def wait(r, carry):
        _copy(r, 0).wait()                           # wait only needs sem + size
        return carry

    jax.lax.fori_loop(0, out_s, wait, 0)


# ---------------- wrapper helpers ----------------
def _pick_tb(B, S, out_S, D, itemsize, budget_bytes=_BLOCK_BUDGET_BYTES):
    """Largest TB dividing B that fits the VMEM budget and keeps grid >= 2."""
    per_b = (2 * ((S + out_S) * D * itemsize + out_S * 4)   # double-buffered blocks
             + out_S * S * itemsize + out_S * D * 4)        # onehot + f32 result temps
    cap = max(1, budget_bytes // per_b)
    best = 1
    for tb in range(1, B + 1):
        if B % tb or tb > cap:
            continue
        if (B // tb) >= 2 or B == 1:   # keep >=2 grid steps for v7x megacore
            best = tb
    return best


def _matmul_gather(x, keep_idx, out_S):
    B, S, D = x.shape
    itemsize = x.dtype.itemsize
    TB = _pick_tb(B, S, out_S, D, itemsize)
    precision = (jax.lax.Precision.HIGHEST if x.dtype == jnp.float32
                 else jax.lax.Precision.DEFAULT)   # bf16 one-hot gather is exact
    kernel = functools.partial(_patch_dropout_matmul_kernel, precision=precision)
    gather_idx = keep_idx.reshape(B, out_S, 1)
    return pl.pallas_call(
        kernel,
        out_shape=jax.ShapeDtypeStruct((B, out_S, D), x.dtype),
        grid=(B // TB,),
        in_specs=[pl.BlockSpec((TB, out_S, 1), lambda b: (b, 0, 0)),
                  pl.BlockSpec((TB, S, D), lambda b: (b, 0, 0))],
        out_specs=pl.BlockSpec((TB, out_S, D), lambda b: (b, 0, 0)),
        compiler_params=pltpu.CompilerParams(
            dimension_semantics=("parallel",),
            vmem_limit_bytes=_VMEM_LIMIT_BYTES),
    )(gather_idx, x)


def _dma_gather(x, keep_idx, out_S):
    B, S, D = x.shape
    return pl.pallas_call(
        _patch_dropout_dma_kernel,
        out_shape=jax.ShapeDtypeStruct((B, out_S, D), x.dtype),
        grid_spec=pltpu.PrefetchScalarGridSpec(
            num_scalar_prefetch=1,                       # keep_idx -> SMEM
            grid=(B,),
            in_specs=[pl.BlockSpec(memory_space=pl.ANY)],  # x stays in HBM
            out_specs=pl.BlockSpec((1, out_S, D), lambda b, idx: (b, 0, 0)),
            scratch_shapes=[pltpu.SemaphoreType.DMA((out_S,))]),
        compiler_params=pltpu.CompilerParams(
            dimension_semantics=("parallel",)),
    )(keep_idx, x)


# ---------------- public entry point ----------------
def patch_dropout(x, key, prob, *, training=True, exclude_first_token=True,
                  gather_impl="auto"):
    """PatchDropout forward. x: (B, S, D) tokens (row 0 = cls token)."""
    assert 0.0 <= prob < 1.0
    if (not training) or prob == 0.0:
        return x

    B, S, D = x.shape
    num_prefix = 1 if exclude_first_token else 0
    num_tokens = S - num_prefix
    num_keep = max(1, int(num_tokens * (1.0 - prob)))
    out_S = num_prefix + num_keep

    # TODO(synk): torch.randn RNG is not bit-reproducible in JAX; the random
    # scores + top-k index selection (B x num_tokens scalars) stay in plain JAX.
    rand = jax.random.normal(key, (B, num_tokens), jnp.float32)
    _, keep_idx = jax.lax.top_k(rand, num_keep)          # descending-score order
    keep_idx = keep_idx.astype(jnp.int32) + num_prefix   # absolute token rows
    if num_prefix:
        keep_idx = jnp.concatenate(
            [jnp.zeros((B, num_prefix), jnp.int32), keep_idx], axis=1)

    if gather_impl == "auto":
        # DMA row gather only pays off when rows are wide enough that per-row
        # DMAs aren't descriptor-bound and we actually skip a decent fraction.
        wide_rows = D * x.dtype.itemsize >= 1024
        gather_impl = "dma" if (wide_rows and prob >= 0.25 and out_S <= 128) \
            else "matmul"

    if gather_impl == "dma":
        return _dma_gather(x, keep_idx, out_S)
    return _matmul_gather(x, keep_idx, out_S)


# ---------------- demo / self-check ----------------
if __name__ == "__main__":
    key = jax.random.PRNGKey(0)
    kx, kx2, kd1, kd2, kd3 = jax.random.split(key, 5)
    prob = 0.5

    # ---- matmul path, f32, exclude_first_token=True ----
    B, S, D = 2, 17, 32              # 1 cls token + 16 patch tokens, width 32
    x = jax.random.normal(kx, (B, S, D), jnp.float32)
    out = jax.block_until_ready(
        patch_dropout(x, kd1, prob, training=True, exclude_first_token=True,
                      gather_impl="matmul"))
    num_keep = max(1, int((S - 1) * (1.0 - prob)))
    assert out.shape == (B, 1 + num_keep, D)
    rand = jax.random.normal(kd1, (B, S - 1), jnp.float32)
    _, ref_idx = jax.lax.top_k(rand, num_keep)
    ref = jnp.concatenate(
        [x[:, :1], jnp.take_along_axis(x[:, 1:], ref_idx[:, :, None], axis=1)],
        axis=1)
    assert jnp.allclose(out, ref, atol=1e-6), "matmul path mismatch (f32)"

    # ---- matmul path, bf16 (native-dtype one-hot gather is exact) ----
    x_bf = x.astype(jnp.bfloat16)
    out_bf = jax.block_until_ready(
        patch_dropout(x_bf, kd1, prob, training=True, exclude_first_token=True,
                      gather_impl="matmul"))
    ref_bf = jnp.concatenate(
        [x_bf[:, :1],
         jnp.take_along_axis(x_bf[:, 1:], ref_idx[:, :, None], axis=1)], axis=1)
    assert jnp.array_equal(out_bf, ref_bf), "matmul path mismatch (bf16)"

    # ---- matmul path, exclude_first_token=False ----
    out2 = jax.block_until_ready(
        patch_dropout(x, kd2, prob, training=True, exclude_first_token=False,
                      gather_impl="matmul"))
    num_keep2 = max(1, int(S * (1.0 - prob)))
    assert out2.shape == (B, num_keep2, D)
    rand2 = jax.random.normal(kd2, (B, S), jnp.float32)
    _, ref_idx2 = jax.lax.top_k(rand2, num_keep2)
    ref2 = jnp.take_along_axis(x, ref_idx2[:, :, None], axis=1)
    assert jnp.allclose(out2, ref2, atol=1e-6), "matmul path mismatch (no-cls)"

    # ---- DMA row-gather path (rows >= 1 KiB: D=256 f32) ----
    B2, S2, D2 = 2, 17, 256
    x2 = jax.random.normal(kx2, (B2, S2, D2), jnp.float32)
    out3 = jax.block_until_ready(
        patch_dropout(x2, kd3, prob, training=True, exclude_first_token=True,
                      gather_impl="dma"))
    num_keep3 = max(1, int((S2 - 1) * (1.0 - prob)))
    assert out3.shape == (B2, 1 + num_keep3, D2)
    rand3 = jax.random.normal(kd3, (B2, S2 - 1), jnp.float32)
    _, ref_idx3 = jax.lax.top_k(rand3, num_keep3)
    ref3 = jnp.concatenate(
        [x2[:, :1],
         jnp.take_along_axis(x2[:, 1:], ref_idx3[:, :, None], axis=1)], axis=1)
    assert jnp.array_equal(out3, ref3), "DMA gather path mismatch"

    # ---- eval / prob==0 paths are identity (no kernel, as in PyTorch) ----
    assert patch_dropout(x, kd1, prob, training=False) is x
    assert patch_dropout(x, kd1, 0.0, training=True) is x

    print("KERNEL_OK")
</pallas_src>

<mosaic_0001>
module attributes {stable_mosaic.version = 11 : i64} {
  func.func @_patch_dropout_matmul_kernel(%arg0: i32, %arg1: memref<1x9x1xi32, #tpu.memory_space<vmem>>, %arg2: memref<1x17x32xf32, #tpu.memory_space<vmem>>, %arg3: memref<1x9x32xf32, #tpu.memory_space<vmem>>) attributes {dimension_semantics = [#tpu.dimension_semantics<parallel>], iteration_bounds = array<i64: 2>, scalar_prefetch = 0 : i64, scratch_operands = 0 : i64, tpu.core_type = #tpu.core_type<tc>, window_params = [{transform_indices = @transform_0, window_bounds = array<i64: 1, 9, 1>}, {transform_indices = @transform_1, window_bounds = array<i64: 1, 17, 32>}, {transform_indices = @transform_2, window_bounds = array<i64: 1, 9, 32>}]} {
    %c0 = arith.constant 0 : index
    %c0_0 = arith.constant 0 : index
    %c0_1 = arith.constant 0 : index
    %0 = vector.load %arg1[%c0, %c0_0, %c0_1] : memref<1x9x1xi32, #tpu.memory_space<vmem>>, vector<1x9x1xi32>
    %c0_2 = arith.constant 0 : index
    %c0_3 = arith.constant 0 : index
    %c0_4 = arith.constant 0 : index
    %1 = vector.load %arg2[%c0_2, %c0_3, %c0_4] : memref<1x17x32xf32, #tpu.memory_space<vmem>>, vector<1x17x32xf32>
    %2 = tpu.iota {dimensions = array<i32: 2>} : vector<1x9x17xi32>
    %3 = vector.broadcast %0 : vector<1x9x1xi32> to vector<1x9x17xi32>
    %4 = arith.cmpi eq, %3, %2 : vector<1x9x17xi32>
    %5 = arith.extui %4 : vector<1x9x17xi1> to vector<1x9x17xi32>
    %6 = arith.sitofp %5 : vector<1x9x17xi32> to vector<1x9x17xf32>
    "tpu.trace_start"() <{level = 10 : i32, message = "bos,bsd->bod"}> : () -> ()
    %cst = arith.constant dense<0.000000e+00> : vector<1x9x32xf32>
    %7 = tpu.matmul %6, %1, %cst {dimension_numbers = #tpu.dot_dimension_numbers<[2], [1], [1], [2], [0, 0, 0, 1, 1, 2], [0], [0]>, precision = #tpu.contract_precision<fp32>} : vector<1x9x17xf32>, vector<1x17x32xf32>, vector<1x9x32xf32> -> vector<1x9x32xf32>
    "tpu.trace_stop"() : () -> ()
    %c0_5 = arith.constant 0 : index
    %c0_6 = arith.constant 0 : index
    %c0_7 = arith.constant 0 : index
    %8 = vector.load %arg3[%c0_5, %c0_6, %c0_7] : memref<1x9x32xf32, #tpu.memory_space<vmem>>, vector<1x9x32xf32>
    tpu.vector_store %arg3[%c0_5, %c0_6, %c0_7], %7 {strides = array<i32>} : memref<1x9x32xf32, #tpu.memory_space<vmem>>, vector<1x9x32xf32>,
    return
  }
  func.func @transform_0(%arg0: i32) -> (i32, i32, i32) {
    %c0_i32 = arith.constant 0 : i32
    %c0_i32_0 = arith.constant 0 : i32
    %c0_i32_1 = arith.constant 0 : i32
    return %arg0, %c0_i32, %c0_i32_0 : i32, i32, i32
  }
  func.func @transform_1(%arg0: i32) -> (i32, i32, i32) {
    %c0_i32 = arith.constant 0 : i32
    %c0_i32_0 = arith.constant 0 : i32
    %c0_i32_1 = arith.constant 0 : i32
    return %arg0, %c0_i32, %c0_i32_0 : i32, i32, i32
  }
  func.func @transform_2(%arg0: i32) -> (i32, i32, i32) {
    %c0_i32 = arith.constant 0 : i32
    %c0_i32_0 = arith.constant 0 : i32
    %c0_i32_1 = arith.constant 0 : i32
    return %arg0, %c0_i32, %c0_i32_0 : i32, i32, i32
  }
}

</mosaic_0001>

<llo_original>
// kernel: tpu_custom_call.1
$region0: #{tpu_custom_call.1}
  #allocation0 [shape = 'u32[]', space=smem, size = 0x4, offset = 0x4, fixed_abs, tag = 'smem constant byte address 0x4 - core index']
  #allocation1 [shape = 'u32[72,128]{1,0:T(1,128)}', space=vmem, size = 0x9000, scoped, tag = 'internal scratch']
  %s0 = inlined_call_operand.vmem [shape: s32[2,9,1], index: 0, kind: input, shape index: {}]
  %s1 = inlined_call_operand.vmem [shape: f32[2,17,32], index: 1, kind: input, shape index: {}]
  %s2 = inlined_call_operand.vmem [shape: f32[2,9,32], index: 2, kind: output, shape index: {}]
  %s3 = sld [smem:[#allocation0]]
  $region41: #{tpu_custom_call.1} parent=0
    _
  %s5 = ssub.s32 1, %s3
  %s6 = scalar_select 0, %s5, %s3
  loop: start=0, step=1, limit=4
  $region2: #{tpu_custom_call.1} parent=0 // loop_pre_header
    _
  $region3: #{tpu_custom_call.1} parent=0 // loop_header
    %s8 = sphi 0, %s12
    %p9 = scmp.ge.s32.totalorder %s8, 4
    %s18 = sphi 0, %s20
    %s21 = sphi 0, %s18
    %s22 = sphi 0, %s21
    %s38 = sphi 0, %s22
    %s44 = sphi 0, %s46
    %s47 = sphi 0, %s44
    %s48 = sphi 0, %s47
    %s64 = sphi 0, %s48
    %s70 = sphi 0, %s72
    %s73 = sphi 0, %s70
    %s74 = sphi 0, %s73
    %s90 = sphi 0, %s74
  $region4: #{tpu_custom_call.1} parent=0 // loop_header_branch
    %11 = sbr.rel (%p9) target = $region8
  $region5: #{tpu_custom_call.1} parent=0 // loop_body
    %s13 = ssub.s32 %s8, 1
    %s14 = ssub.s32 %s8, 2
    %s15 = sadd.s32 %s8, 1
    %s16 = ssub.s32 %s8, %s15
    %p17 = scmp.eq.s32.totalorder %s16, 0
    %s19 = sadd.s32 %s18, 1
    %s20 = scalar_select %p17, %s18, %s19
    %p23 = pneg %p17
    %p24 = scmp.eq.s32.totalorder %s8, 1
    %p25 = por %p23, %p24
    %p26 = scmp.ne.s32.totalorder %s18, %s21
    %p27 = scmp.eq.s32.totalorder %s8, 0
    %p28 = por %p26, %p27
    %p29 = scmp.ne.s32.totalorder %s18, %s21
    %p30 = scmp.eq.s32.totalorder %s13, 1
    %p31 = por %p29, %p30
    %p32 = scmp.ne.s32.totalorder %s21, %s22
    %p33 = scmp.eq.s32.totalorder %s13, 0
    %p34 = por %p32, %p33
    %p35 = scmp.ne.s32.totalorder %s21, %s22
    %p36 = scmp.eq.s32.totalorder %s14, 1
    %p37 = por %p35, %p36
    %p39 = scmp.ne.s32.totalorder %s22, %s38
    %p40 = scmp.eq.s32.totalorder %s14, 0
    %p41 = por %p39, %p40
    %s42 = ssub.s32 %s8, %s15
    %p43 = scmp.eq.s32.totalorder %s42, 0
    %s45 = sadd.s32 %s44, 1
    %s46 = scalar_select %p43, %s44, %s45
    %p49 = pneg %p43
    %p50 = scmp.eq.s32.totalorder %s8, 1
    %p51 = por %p49, %p50
    %p52 = scmp.ne.s32.totalorder %s44, %s47
    %p53 = scmp.eq.s32.totalorder %s8, 0
    %p54 = por %p52, %p53
    %p55 = scmp.ne.s32.totalorder %s44, %s47
    %p56 = scmp.eq.s32.totalorder %s13, 1
    %p57 = por %p55, %p56
    %p58 = scmp.ne.s32.totalorder %s47, %s48
    %p59 = scmp.eq.s32.totalorder %s13, 0
    %p60 = por %p58, %p59
    %p61 = scmp.ne.s32.totalorder %s47, %s48
    %p62 = scmp.eq.s32.totalorder %s14, 1
    %p63 = por %p61, %p62
    %p65 = scmp.ne.s32.totalorder %s48, %s64
    %p66 = scmp.eq.s32.totalorder %s14, 0
    %p67 = por %p65, %p66
    %s68 = ssub.s32 %s8, %s15
    %p69 = scmp.eq.s32.totalorder %s68, 0
    %s71 = sadd.s32 %s70, 1
    %s72 = scalar_select %p69, %s70, %s71
    %p75 = pneg %p69
    %p76 = scmp.eq.s32.totalorder %s8, 1
    %p77 = por %p75, %p76
    %p78 = scmp.ne.s32.totalorder %s70, %s73
    %p79 = scmp.eq.s32.totalorder %s8, 0
    %p80 = por %p78, %p79
    %p81 = scmp.ne.s32.totalorder %s70, %s73
    %p82 = scmp.eq.s32.totalorder %s13, 1
    %p83 = por %p81, %p82
    %p84 = scmp.ne.s32.totalorder %s73, %s74
    %p85 = scmp.eq.s32.totalorder %s13, 0
    %p86 = por %p84, %p85
    %p87 = scmp.ne.s32.totalorder %s73, %s74
    %p88 = scmp.eq.s32.totalorder %s14, 1
    %p89 = por %p87, %p88
    %p91 = scmp.ne.s32.totalorder %s74, %s90
    %p92 = scmp.eq.s32.totalorder %s14, 0
    %p93 = por %p91, %p92
    %p94 = scmp.le.s32.totalorder 1, %s8
    %p95 = scmp.lt.s32.totalorder %s8, 3
    %p96 = pnand %p94, %p95
    %p97 = pneg %p96
    // Predicated region
    $region9: #{tpu_custom_call.1} parent=5 // pred_check
      _
    $region10: #{tpu_custom_call.1} parent=5 // pred_check_branch
      %99 = sbr.rel (%p96) target = $region12
    $region11: #{tpu_custom_call.1} parent=5 // pred_region
      %s100 = ssub.s32 %s8, 1
    $region12: #{tpu_custom_call.1} parent=5 // pred_fallthru
      _
    %p101 = scmp.lt.s32.totalorder %s8, 2
    // Predicated region
    $region13: #{tpu_custom_call.1} parent=5 // pred_check
      %p102 = pneg %p101
    $region14: #{tpu_custom_call.1} parent=5 // pred_check_branch
      %104 = sbr.rel (%p102) target = $region16
    $region15: #{tpu_custom_call.1} parent=5 // pred_region
      // Predicated region
      $region17: #{tpu_custom_call.1} parent=15 // pred_check
        %p105 = pneg %p28
      $region18: #{tpu_custom_call.1} parent=15 // pred_check_branch
        %107 = sbr.rel (%p105) target = $region20
      $region19: #{tpu_custom_call.1} parent=15 // pred_region
        %p108 = scmp.lt.s32.totalorder %s8, 1
        %s109 = scalar_select %p108, %s8, 1
        %s110 = smul.addr %s109, 2
        %s111 = smul.addr %s110, 8
        %s112 = scalar_lea.vmem %s0, %s111
      $region20: #{tpu_custom_call.1} parent=15 // pred_fallthru
        _
      // Predicated region
      $region21: #{tpu_custom_call.1} parent=15 // pred_check
        %p113 = pneg %p54
      $region22: #{tpu_custom_call.1} parent=15 // pred_check_branch
        %115 = sbr.rel (%p113) target = $region24
      $region23: #{tpu_custom_call.1} parent=15 // pred_region
        %p116 = scmp.lt.s32.totalorder %s8, 1
        %s117 = scalar_select %p116, %s8, 1
        %s118 = smul.addr %s117, 3
        %s119 = smul.addr %s118, 8
        %s120 = scalar_lea.vmem %s1, %s119
      $region24: #{tpu_custom_call.1} parent=15 // pred_fallthru
        _
    $region16: #{tpu_custom_call.1} parent=5 // pred_fallthru
      _
    %p121 = scmp.le.s32.totalorder 1, %s8
    %p122 = scmp.lt.s32.totalorder %s8, 3
    %p123 = pnand %p121, %p122
    %p124 = pneg %p123
    // Predicated region
    $region25: #{tpu_custom_call.1} parent=5 // pred_check
      _
    $region26: #{tpu_custom_call.1} parent=5 // pred_check_branch
      %126 = sbr.rel (%p123) target = $region28
    $region27: #{tpu_custom_call.1} parent=5 // pred_region
      %s127 = ssub.s32 %s8, 1
      %p128 = scmp.lt.s32.totalorder %s13, 1
      %s129 = scalar_select %p128, %s13, 1
      %s130 = smul.addr %s129, 2
      %s131 = smul.addr %s130, 8
      %s132 = scalar_lea.vmem %s0, %s131
      %p133 = pneg %p34
      %p134 = pneg %p31
      %p135 = scmp.lt.s32.totalorder %s13, 1
      %s136 = scalar_select %p135, %s13, 1
      %s137 = smul.addr %s136, 3
      %s138 = smul.addr %s137, 8
      %s139 = scalar_lea.vmem %s1, %s138
      %p140 = pneg %p60
      %p141 = pneg %p57
      %p142 = pneg %p86
      %p143 = pneg %p83
      %p144 = scmp.lt.s32.totalorder %s13, 1
      %s145 = scalar_select %p144, %s13, 1
      %s146 = smul.addr %s145, 2
      %s147 = smul.addr %s146, 8
      %s148 = scalar_lea.vmem %s2, %s147
      %p149 = scmp.lt.s32.totalorder %s13, 1
      %s150 = scalar_select %p149, %s13, 1
      %s151 = smul.addr %s150, 2
      %s152 = smul.addr %s151, 8
      %s153 = scalar_lea.vmem %s0, %s152
      %p154 = scmp.lt.s32.totalorder %s13, 1
      %s155 = scalar_select %p154, %s13, 1
      %s156 = smul.addr %s155, 3
      %s157 = smul.addr %s156, 8
      %s158 = scalar_lea.vmem %s1, %s157
      %p159 = scmp.lt.s32.totalorder %s13, 1
      %s160 = scalar_select %p159, %s13, 1
      %s161 = smul.addr %s160, 2
      %s162 = smul.addr %s161, 8
      %s163 = scalar_lea.vmem %s2, %s162
      %v164 = vld [vmem:[%s153] sm:$0xff]
      %v165 = vld [vmem:[%s153 + $0x8] sm:$0x1]
      %v166 = vld [vmem:[%s158] sm:$0xff]
      %v167 = vld [vmem:[%s158 + $0x8] sm:$0xff]
      %v168 = vld [vmem:[%s158 + $0x10] sm:$0x1]
      %v169 = vlaneseq
      %v170 = vand.u32 %v169, 127
      %171 = vset.pattern.permute.xlu0 0
      %172 = vperm.xlu0 %171, %v164
      %v173 = vpop.permute.xlu0 %172
      %174 = vset.pattern.permute.xlu0 0
      %175 = vperm.xlu0 %174, %v165
      %v176 = vpop.permute.xlu0 %175
      %vm177 = vcmp.eq.s32.totalorder %v173, %v170
      %vm178 = vcmp.eq.s32.totalorder %v176, %v170
      %v179 = vsel %vm177, 1, 0
      %v180 = vsel %vm178, 1, 0
      %v181 = vcvt.s32.f32 %v179
      %v182 = vcvt.s32.f32 %v180
      %vm183 = vcmask 138240
      %v185 = vsel %vm183, %v181, 0
      %v188 = vsel %vm183, %v182, 0
      %vm190 = vcmask 1040384
      %v192 = vsel %vm190, %v168, 0
      %194 = vmatpush.msra.mxu0 0.0
      %195 = vmatpush.msra.mxu0 0.0
      %196 = vmatpush.msra.mxu0 0.0
      %197 = vmatpush.msra.mxu0 0.0
      %198 = vmatpush.msra.mxu0 0.0
      %199 = vmatpush.msra.mxu0 0.0
      %200 = vmatpush.msra.mxu0 0.0
      %201 = vmatpush.msra.mxu0 0.0
      %202 = vmatpush.msra.mxu0 0.0
      %203 = vmatpush.msra.mxu0 0.0
      %204 = vmatpush.msra.mxu0 0.0
      %205 = vmatpush.msra.mxu0 0.0
      %206 = vmatpush.msra.mxu0 0.0
      %v207 = vand.u32 %v192, 4294901760
      %208 = vmatpush.msra.mxu0 %v207
      %v209 = vand.u32 %v167, 4294901760
      %210 = vmatpush.msra.mxu0 %v209
      %v211 = vand.u32 %v166, 4294901760
      %212 = vmatpush.msra.mxu0 %v211
      %v213 = vand.u32 %v185, 4294901760
      %v214 = vsub.f32 %v185, %v213
      %v215 = vand.u32 %v214, 4294901760
      %v216 = vsub.f32 %v214, %v215
      %v217 = vand.u32 %v216, 4294901760
      %218 = vmatmul.f32.gmra.mxu0 %v217
      %v219 = vpop.f32.mrf.mxu0
      %v220 = vadd.f32 0.0, %v219
      %v221 = vand.u32 %v188, 4294901760
      %v222 = vsub.f32 %v188, %v221
      %v223 = vand.u32 %v222, 4294901760
      %v224 = vsub.f32 %v222, %v223
      %v225 = vand.u32 %v224, 4294901760
      %226 = vmatmul.f32.gmra.mxu0 %v225
      %v227 = vpop.f32.mrf.mxu0
      %v228 = vadd.f32 0.0, %v227
      %229 = vdwg.mxu0
      %230 = vmatpush.msra.mxu0 0.0
      %231 = vmatpush.msra.mxu0 0.0
      %232 = vmatpush.msra.mxu0 0.0
      %233 = vmatpush.msra.mxu0 0.0
      %234 = vmatpush.msra.mxu0 0.0
      %235 = vmatpush.msra.mxu0 0.0
      %236 = vmatpush.msra.mxu0 0.0
      %237 = vmatpush.msra.mxu0 0.0
      %238 = vmatpush.msra.mxu0 0.0
      %239 = vmatpush.msra.mxu0 0.0
      %240 = vmatpush.msra.mxu0 0.0
      %241 = vmatpush.msra.mxu0 0.0
      %242 = vmatpush.msra.mxu0 0.0
      %v243 = vand.u32 %v192, 4294901760
      %v244 = vsub.f32 %v192, %v243
      %v245 = vand.u32 %v244, 4294901760
      %v246 = vsub.f32 %v244, %v245
      %v247 = vand.u32 %v246, 4294901760
      %248 = vmatpush.msra.mxu0 %v247
      %v249 = vand.u32 %v167, 4294901760
      %v250 = vsub.f32 %v167, %v249
      %v251 = vand.u32 %v250, 4294901760
      %v252 = vsub.f32 %v250, %v251
      %v253 = vand.u32 %v252, 4294901760
      %254 = vmatpush.msra.mxu0 %v253
      %v255 = vand.u32 %v166, 4294901760
      %v256 = vsub.f32 %v166, %v255
      %v257 = vand.u32 %v256, 4294901760
      %v258 = vsub.f32 %v256, %v257
      %v259 = vand.u32 %v258, 4294901760
      %260 = vmatpush.msra.mxu0 %v259
      %v261 = vand.u32 %v185, 4294901760
      %262 = vmatmul.f32.gmra.mxu0 %v261
      %v263 = vpop.f32.mrf.mxu0
      %v264 = vadd.f32 %v220, %v263
      %v265 = vand.u32 %v188, 4294901760
      %266 = vmatmul.f32.gmra.mxu0 %v265
      %v267 = vpop.f32.mrf.mxu0
      %v268 = vadd.f32 %v228, %v267
      %269 = vdwg.mxu0
      %270 = vmatpush.msra.mxu0 0.0
      %271 = vmatpush.msra.mxu0 0.0
      %272 = vmatpush.msra.mxu0 0.0
      %273 = vmatpush.msra.mxu0 0.0
      %274 = vmatpush.msra.mxu0 0.0
      %275 = vmatpush.msra.mxu0 0.0
      %276 = vmatpush.msra.mxu0 0.0
      %277 = vmatpush.msra.mxu0 0.0
      %278 = vmatpush.msra.mxu0 0.0
      %279 = vmatpush.msra.mxu0 0.0
      %280 = vmatpush.msra.mxu0 0.0
      %281 = vmatpush.msra.mxu0 0.0
      %282 = vmatpush.msra.mxu0 0.0
      %v283 = vand.u32 %v192, 4294901760
      %v284 = vsub.f32 %v192, %v283
      %285 = vmatpush.msra.mxu0 %v284
      %v286 = vand.u32 %v167, 4294901760
      %v287 = vsub.f32 %v167, %v286
      %288 = vmatpush.msra.mxu0 %v287
      %v289 = vand.u32 %v166, 4294901760
      %v290 = vsub.f32 %v166, %v289
      %291 = vmatpush.msra.mxu0 %v290
      %v292 = vand.u32 %v185, 4294901760
      %v293 = vsub.f32 %v185, %v292
      %294 = vmatmul.f32.gmra.mxu0 %v293
      %v295 = vpop.f32.mrf.mxu0
      %v296 = vadd.f32 %v264, %v295
      %v297 = vand.u32 %v188, 4294901760
      %v298 = vsub.f32 %v188, %v297
      %299 = vmatmul.f32.gmra.mxu0 %v298
      %v300 = vpop.f32.mrf.mxu0
      %v301 = vadd.f32 %v268, %v300
      %302 = vdwg.mxu0
      %303 = vmatpush.msra.mxu0 0.0
      %304 = vmatpush.msra.mxu0 0.0
      %305 = vmatpush.msra.mxu0 0.0
      %306 = vmatpush.msra.mxu0 0.0
      %307 = vmatpush.msra.mxu0 0.0
      %308 = vmatpush.msra.mxu0 0.0
      %309 = vmatpush.msra.mxu0 0.0
      %310 = vmatpush.msra.mxu0 0.0
      %311 = vmatpush.msra.mxu0 0.0
      %312 = vmatpush.msra.mxu0 0.0
      %313 = vmatpush.msra.mxu0 0.0
      %314 = vmatpush.msra.mxu0 0.0
      %315 = vmatpush.msra.mxu0 0.0
      %v316 = vand.u32 %v192, 4294901760
      %317 = vmatpush.msra.mxu0 %v316
      %v318 = vand.u32 %v167, 4294901760
      %319 = vmatpush.msra.mxu0 %v318
      %v320 = vand.u32 %v166, 4294901760
      %321 = vmatpush.msra.mxu0 %v320
      %v322 = vand.u32 %v185, 4294901760
      %v323 = vsub.f32 %v185, %v322
      %v324 = vand.u32 %v323, 4294901760
      %325 = vmatmul.f32.gmra.mxu0 %v324
      %v326 = vpop.f32.mrf.mxu0
      %v327 = vadd.f32 %v296, %v326
      %v328 = vand.u32 %v188, 4294901760
      %v329 = vsub.f32 %v188, %v328
      %v330 = vand.u32 %v329, 4294901760
      %331 = vmatmul.f32.gmra.mxu0 %v330
      %v332 = vpop.f32.mrf.mxu0
      %v333 = vadd.f32 %v301, %v332
      %334 = vdwg.mxu0
      %335 = vmatpush.msra.mxu0 0.0
      %336 = vmatpush.msra.mxu0 0.0
      %337 = vmatpush.msra.mxu0 0.0
      %338 = vmatpush.msra.mxu0 0.0
      %339 = vmatpush.msra.mxu0 0.0
      %340 = vmatpush.msra.mxu0 0.0
      %341 = vmatpush.msra.mxu0 0.0
      %342 = vmatpush.msra.mxu0 0.0
      %343 = vmatpush.msra.mxu0 0.0
      %344 = vmatpush.msra.mxu0 0.0
      %345 = vmatpush.msra.mxu0 0.0
      %346 = vmatpush.msra.mxu0 0.0
      %347 = vmatpush.msra.mxu0 0.0
      %v348 = vand.u32 %v192, 4294901760
      %v349 = vsub.f32 %v192, %v348
      %v350 = vand.u32 %v349, 4294901760
      %351 = vmatpush.msra.mxu0 %v350
      %v352 = vand.u32 %v167, 4294901760
      %v353 = vsub.f32 %v167, %v352
      %v354 = vand.u32 %v353, 4294901760
      %355 = vmatpush.msra.mxu0 %v354
      %v356 = vand.u32 %v166, 4294901760
      %v357 = vsub.f32 %v166, %v356
      %v358 = vand.u32 %v357, 4294901760
      %359 = vmatpush.msra.mxu0 %v358
      %v360 = vand.u32 %v185, 4294901760
      %361 = vmatmul.f32.gmra.mxu0 %v360
      %v362 = vpop.f32.mrf.mxu0
      %v363 = vadd.f32 %v327, %v362
      %v364 = vand.u32 %v188, 4294901760
      %365 = vmatmul.f32.gmra.mxu0 %v364
      %v366 = vpop.f32.mrf.mxu0
      %v367 = vadd.f32 %v333, %v366
      %368 = vdwg.mxu0
      %369 = vmatpush.msra.mxu0 0.0
      %370 = vmatpush.msra.mxu0 0.0
      %371 = vmatpush.msra.mxu0 0.0
      %372 = vmatpush.msra.mxu0 0.0
      %373 = vmatpush.msra.mxu0 0.0
      %374 = vmatpush.msra.mxu0 0.0
      %375 = vmatpush.msra.mxu0 0.0
      %376 = vmatpush.msra.mxu0 0.0
      %377 = vmatpush.msra.mxu0 0.0
      %378 = vmatpush.msra.mxu0 0.0
      %379 = vmatpush.msra.mxu0 0.0
      %380 = vmatpush.msra.mxu0 0.0
      %381 = vmatpush.msra.mxu0 0.0
      %v382 = vand.u32 %v192, 4294901760
      %383 = vmatpush.msra.mxu0 %v382
      %v384 = vand.u32 %v167, 4294901760
      %385 = vmatpush.msra.mxu0 %v384
      %v386 = vand.u32 %v166, 4294901760
      %387 = vmatpush.msra.mxu0 %v386
      %v388 = vand.u32 %v185, 4294901760
      %389 = vmatmul.f32.gmra.mxu0 %v388
      %v390 = vpop.f32.mrf.mxu0
      %v391 = vadd.f32 %v363, %v390
      %v392 = vand.u32 %v188, 4294901760
      %393 = vmatmul.f32.gmra.mxu0 %v392
      %v394 = vpop.f32.mrf.mxu0
      %v395 = vadd.f32 %v367, %v394
      %396 = vdwg.mxu0
      %vm397 = vcmask 261120
      %398 = vst.msk [vmem:[%s163] sm:$0xff] %vm397, %v391
      %vm399 = vcmask 253952
      %400 = vst.msk [vmem:[%s163 + $0x8] sm:$0x1] %vm399, %v395
      %p401 = scmp.lt.s32.totalorder %s13, 1
      %s402 = scalar_select %p401, %s13, 1
      %s403 = smul.addr %s402, 2
      %s404 = smul.addr %s403, 8
      %s405 = scalar_lea.vmem %s2, %s404
      // Predicated region
      $region29: #{tpu_custom_call.1} parent=27 // pred_check
        %p406 = pneg %p83
      $region30: #{tpu_custom_call.1} parent=27 // pred_check_branch
        %408 = sbr.rel (%p406) target = $region32
      $region31: #{tpu_custom_call.1} parent=27 // pred_region
        _
      $region32: #{tpu_custom_call.1} parent=27 // pred_fallthru
        _
    $region28: #{tpu_custom_call.1} parent=5 // pred_fallthru
      _
    %p409 = scmp.le.s32.totalorder 2, %s8
    // Predicated region
    $region33: #{tpu_custom_call.1} parent=5 // pred_check
      %p410 = pneg %p409
    $region34: #{tpu_custom_call.1} parent=5 // pred_check_branch
      %412 = sbr.rel (%p410) target = $region36
    $region35: #{tpu_custom_call.1} parent=5 // pred_region
      %s413 = ssub.s32 %s8, 2
      // Predicated region
      $region37: #{tpu_custom_call.1} parent=35 // pred_check
        %p414 = pneg %p89
      $region38: #{tpu_custom_call.1} parent=35 // pred_check_branch
        %416 = sbr.rel (%p414) target = $region40
      $region39: #{tpu_custom_call.1} parent=35 // pred_region
        %p417 = scmp.lt.s32.totalorder %s14, 1
        %s418 = scalar_select %p417, %s14, 1
        %s419 = smul.addr %s418, 2
        %s420 = smul.addr %s419, 8
        %s421 = scalar_lea.vmem %s2, %s420
      $region40: #{tpu_custom_call.1} parent=35 // pred_fallthru
        _
    $region36: #{tpu_custom_call.1} parent=5 // pred_fallthru
      _
  $region6: #{tpu_custom_call.1} parent=0 // loop_footer
    %s12 = sadd.s32 1, %s8
  $region7: #{tpu_custom_call.1} parent=0 // loop_footer_branch
    %7 = sbr.rel target = $region3
  $region8: #{tpu_custom_call.1} parent=0 // loop_exit
    _

</llo_original>
